<compile_context>
chip_gen: v7x
topology: tpu7x:2x2x1
jax: 0.10.0
libtpu: 0.0.40
codegen_flags: <defaults>
</compile_context>

<pallas_src>
import functools

import jax
import jax.numpy as jnp
from jax.experimental import pallas as pl
from jax.experimental.pallas import tpu as pltpu


def _pred_kernel(x_ref, w_ref, b_ref, o_ref):
    # z = x . w + b : VPU multiply + lane (XLU) reduction instead of an N=1 MXU matmul.
    x = x_ref[...]                                  # (TILE_B, K) f32
    w = w_ref[...]                                  # (1, K)      f32, broadcasts over rows
    z = jnp.sum(x * w, axis=-1, keepdims=True) + b_ref[0, 0]
    # sigmoid(z) = 1 / (1 + exp(-z)); exp and approx-reciprocal both run on the EUP slot.
    o_ref[...] = pl.reciprocal(1.0 + jnp.exp(-z), approx=True).astype(o_ref.dtype)


def _loss_kernel(x_ref, w_ref, b_ref, y_ref, o_ref, acc_ref, *, n_valid, tile_rows):
    # Tiled accumulator (P3): zero at step 0, accumulate per-tile partial sums,
    # divide by the true batch and store on the last step.
    i = pl.program_id(0)

    @pl.when(i == 0)
    def _init():
        acc_ref[...] = jnp.zeros_like(acc_ref)

    x = x_ref[...]                                  # (TILE_B, K)
    w = w_ref[...]                                  # (1, K)
    z = jnp.sum(x * w, axis=-1, keepdims=True) + b_ref[0, 0]
    y_pred = pl.reciprocal(1.0 + jnp.exp(-z), approx=True)
    diff = jnp.abs(y_pred - y_ref[...])             # (TILE_B, 1)

    if n_valid % tile_rows != 0:
        # Mask zero-padded rows of the last tile (static decision: only emitted if padded).
        row = i * tile_rows + jax.lax.broadcasted_iota(jnp.int32, diff.shape, 0)
        diff = jnp.where(row < n_valid, diff, 0.0)

    acc_ref[...] += jnp.sum(diff, keepdims=True)    # (1, 1) partial sum

    @pl.when(i == pl.num_programs(0) - 1)
    def _finalize():
        o_ref[...] = acc_ref[...] * (1.0 / n_valid)


def _tile_rows(batch, max_tile):
    """Pick a batch tile: big enough to keep the DMA pipeline full, rounded to 8 sublanes,
    with minimal padding (tiles sized by splitting the batch evenly)."""
    num_tiles = -(-batch // max_tile)
    tile = -(-batch // num_tiles)
    return ((tile + 7) // 8) * 8


def _pad_rows(a, rows):
    if a.shape[0] == rows:
        return a
    pad = [(0, rows - a.shape[0])] + [(0, 0)] * (a.ndim - 1)
    return jnp.pad(a, pad)


def test_torch_forward(x, w, b, y=None, *, max_tile_rows=8192):
    """Reproduces TestTorch.forward.

    x: (batch, input_size) f32
    w: (1, input_size)     f32   (PyTorch nn.Linear weight, unmodified layout)
    b: (1, 1)              f32
    y: optional (batch, 1) f32 targets
    Returns (batch, 1) sigmoid(linear(x)), or a scalar mean-L1 loss if y is given.
    """
    batch, k = x.shape
    tile_b = _tile_rows(batch, max_tile_rows)
    num_tiles = -(-batch // tile_b)
    batch_padded = num_tiles * tile_b

    x_p = _pad_rows(jnp.asarray(x, jnp.float32), batch_padded)
    w2 = jnp.asarray(w, jnp.float32).reshape(1, k)
    b2 = jnp.asarray(b, jnp.float32).reshape(1, 1)

    x_spec = pl.BlockSpec((tile_b, k), lambda i: (i, 0))
    w_spec = pl.BlockSpec((1, k), lambda i: (0, 0))
    b_spec = pl.BlockSpec(memory_space=pltpu.MemorySpace.SMEM)   # scalar bias in SMEM

    cost = pl.CostEstimate(
        flops=2 * batch_padded * k + 4 * batch_padded,
        transcendentals=batch_padded,
        bytes_accessed=batch_padded * (k + 2) * 4,
    )
    vmem_limit = 32 * 1024 * 1024   # safe on v5e/v6e/v7x; tiles here use ~2 MiB double-buffered

    if y is None:
        out = pl.pallas_call(
            _pred_kernel,
            out_shape=jax.ShapeDtypeStruct((batch_padded, 1), jnp.float32),
            grid=(num_tiles,),
            in_specs=[x_spec, w_spec, b_spec],
            out_specs=pl.BlockSpec((tile_b, 1), lambda i: (i, 0)),
            compiler_params=pltpu.CompilerParams(
                dimension_semantics=("parallel",),
                vmem_limit_bytes=vmem_limit,
            ),
            cost_estimate=cost,
        )(x_p, w2, b2)
        return out[:batch] if batch_padded != batch else out

    y_p = _pad_rows(jnp.asarray(y, jnp.float32).reshape(batch, 1), batch_padded)
    kernel = functools.partial(_loss_kernel, n_valid=batch, tile_rows=tile_b)
    total = pl.pallas_call(
        kernel,
        out_shape=jax.ShapeDtypeStruct((1, 1), jnp.float32),
        grid=(num_tiles,),
        in_specs=[x_spec, w_spec, b_spec,
                  pl.BlockSpec((tile_b, 1), lambda i: (i, 0))],
        out_specs=pl.BlockSpec((1, 1), lambda i: (0, 0)),
        scratch_shapes=[pltpu.VMEM((1, 1), jnp.float32)],
        compiler_params=pltpu.CompilerParams(
            dimension_semantics=("arbitrary",),   # reduction / accumulator axis
            vmem_limit_bytes=vmem_limit,
        ),
        cost_estimate=cost,
    )(x_p, w2, b2, y_p)
    return total.reshape(())


if __name__ == "__main__":
    # Small shapes consistent with the module: batch=8, input_size=32.
    batch, input_size = 8, 32

    key = jax.random.PRNGKey(0)
    kx, ky, kw, kb = jax.random.split(key, 4)

    x = jax.random.normal(kx, (batch, input_size), dtype=jnp.float32)
    y = jax.random.uniform(ky, (batch, 1), dtype=jnp.float32)

    # PyTorch-Linear-style uniform(-1/sqrt(fan_in), 1/sqrt(fan_in)) init; weight kept in
    # native (out_features=1, in_features) layout.
    bound = 1.0 / (input_size ** 0.5)
    w = jax.random.uniform(kw, (1, input_size), dtype=jnp.float32, minval=-bound, maxval=bound)
    b = jax.random.uniform(kb, (1, 1), dtype=jnp.float32, minval=-bound, maxval=bound)

    # Plain-JAX reference.
    ref_pred = jax.nn.sigmoid(x @ w.T + b)
    ref_loss = jnp.mean(jnp.abs(ref_pred - y))

    # Inference path (y=None): sigmoid(linear(x)); single tile, grid=(1,).
    y_pred = test_torch_forward(x, w, b)
    jax.block_until_ready(y_pred)
    # Training path (y given): mean L1 loss.
    loss = test_torch_forward(x, w, b, y)
    jax.block_until_ready(loss)

    assert y_pred.shape == (batch, 1)
    assert jnp.allclose(y_pred, ref_pred, atol=2e-3), "prediction mismatch"
    assert jnp.allclose(loss, ref_loss, atol=2e-3), "loss mismatch"

    # Also exercise the multi-tile path (grid > 1, padded batch, masked loss accumulator)
    # at a still-small size by capping the tile at 8 rows.
    batch2 = 20
    kx2, ky2 = jax.random.split(jax.random.PRNGKey(1))
    x2 = jax.random.normal(kx2, (batch2, input_size), dtype=jnp.float32)
    y2 = jax.random.uniform(ky2, (batch2, 1), dtype=jnp.float32)
    ref_pred2 = jax.nn.sigmoid(x2 @ w.T + b)
    ref_loss2 = jnp.mean(jnp.abs(ref_pred2 - y2))

    y_pred2 = test_torch_forward(x2, w, b, max_tile_rows=8)
    loss2 = test_torch_forward(x2, w, b, y2, max_tile_rows=8)
    jax.block_until_ready((y_pred2, loss2))

    assert y_pred2.shape == (batch2, 1)
    assert jnp.allclose(y_pred2, ref_pred2, atol=2e-3), "tiled prediction mismatch"
    assert jnp.allclose(loss2, ref_loss2, atol=2e-3), "tiled loss mismatch"

    print("KERNEL_OK")
</pallas_src>

<mosaic_0001>
module attributes {stable_mosaic.version = 11 : i64} {
  func.func @_pred_kernel(%arg0: i32, %arg1: memref<8x32xf32, #tpu.memory_space<vmem>>, %arg2: memref<1x32xf32, #tpu.memory_space<vmem>>, %arg3: memref<1x1xf32, #tpu.memory_space<smem>>, %arg4: memref<8x1xf32, #tpu.memory_space<vmem>>) attributes {dimension_semantics = [#tpu.dimension_semantics<parallel>], iteration_bounds = array<i64: 1>, scalar_prefetch = 0 : i64, scratch_operands = 0 : i64, tpu.core_type = #tpu.core_type<tc>, window_params = [{transform_indices = @transform_0, window_bounds = array<i64: 8, 32>}, {pipeline_mode = #tpu.pipeline_mode<synchronous>, transform_indices = @transform_1, window_bounds = array<i64: 1, 32>}, {transform_indices = @transform_2, window_bounds = array<i64: 1, 1>}, {transform_indices = @transform_3, window_bounds = array<i64: 8, 1>}]} {
    %c0 = arith.constant 0 : index
    %c0_0 = arith.constant 0 : index
    %0 = vector.load %arg1[%c0, %c0_0] : memref<8x32xf32, #tpu.memory_space<vmem>>, vector<8x32xf32>
    %c0_1 = arith.constant 0 : index
    %c0_2 = arith.constant 0 : index
    %1 = vector.load %arg2[%c0_1, %c0_2] : memref<1x32xf32, #tpu.memory_space<vmem>>, vector<1x32xf32>
    %2 = vector.broadcast %1 : vector<1x32xf32> to vector<8x32xf32>
    %3 = arith.mulf %0, %2 : vector<8x32xf32>
    %cst = arith.constant dense<0.000000e+00> : vector<8xf32>
    %4 = vector.multi_reduction <add>, %3, %cst [1] : vector<8x32xf32> to vector<8xf32>
    %5 = vector.shape_cast %4 : vector<8xf32> to vector<8x1xf32>
    %c0_3 = arith.constant 0 : index
    %c0_4 = arith.constant 0 : index
    %6 = memref.load %arg3[%c0_3, %c0_4] : memref<1x1xf32, #tpu.memory_space<smem>>
    %7 = vector.broadcast %6 : f32 to vector<8x1xf32>
    %8 = arith.addf %5, %7 : vector<8x1xf32>
    %cst_5 = arith.constant 0.000000e+00 : f32
    %9 = vector.broadcast %cst_5 : f32 to vector<8x1xf32>
    %10 = arith.subf %9, %8 : vector<8x1xf32>
    %11 = math.exp %10 : vector<8x1xf32>
    %cst_6 = arith.constant 1.000000e+00 : f32
    %12 = vector.broadcast %cst_6 : f32 to vector<8x1xf32>
    %13 = arith.addf %12, %11 : vector<8x1xf32>
    %14 = tpu.reciprocal %13 {approx = true} : vector<8x1xf32> -> vector<8x1xf32>
    %c0_7 = arith.constant 0 : index
    %c0_8 = arith.constant 0 : index
    %15 = vector.load %arg4[%c0_7, %c0_8] : memref<8x1xf32, #tpu.memory_space<vmem>>, vector<8x1xf32>
    tpu.vector_store %arg4[%c0_7, %c0_8], %14 {strides = array<i32>} : memref<8x1xf32, #tpu.memory_space<vmem>>, vector<8x1xf32>,
    return
  }
  func.func @transform_0(%arg0: i32) -> (i32, i32) {
    %c0_i32 = arith.constant 0 : i32
    %c0_i32_0 = arith.constant 0 : i32
    return %arg0, %c0_i32 : i32, i32
  }
  func.func @transform_1(%arg0: i32) -> (i32, i32) {
    %c0_i32 = arith.constant 0 : i32
    %c0_i32_0 = arith.constant 0 : i32
    %c0_i32_1 = arith.constant 0 : i32
    return %c0_i32, %c0_i32_0 : i32, i32
  }
  func.func @transform_2(%arg0: i32) -> (i32, i32) {
    %c0_i32 = arith.constant 0 : i32
    %c0_i32_0 = arith.constant 0 : i32
    %c0_i32_1 = arith.constant 0 : i32
    return %c0_i32, %c0_i32_0 : i32, i32
  }
  func.func @transform_3(%arg0: i32) -> (i32, i32) {
    %c0_i32 = arith.constant 0 : i32
    %c0_i32_0 = arith.constant 0 : i32
    return %arg0, %c0_i32 : i32, i32
  }
}

</mosaic_0001>

<llo_original>
// kernel: tpu_custom_call.1
$region0: #{tpu_custom_call.1}
  #allocation0 [shape = 'u32[]', space=smem, size = 0x4, offset = 0x4, fixed_abs, tag = 'smem constant byte address 0x4 - core index']
  #allocation1 [shape = 'u32[144,128]{1,0:T(1,128)}', space=vmem, size = 0x12000, scoped, tag = 'internal scratch']
  #allocation2 [shape = 'f32[1,1]{1,0:T(1,128)S(6)}', space=smem, size = 0x200, scoped, tag = 'scoped memory for tpu_custom_call.1']
  %s0 = inlined_call_operand.hbm [shape: f32[8,32], index: 0, kind: input, shape index: {}]
  %s1 = inlined_call_operand.vmem [shape: f32[1,32], index: 1, kind: input, shape index: {}]
  %s2 = inlined_call_operand.<no memory space> [shape: f32[1,1], index: 2, kind: input, shape index: {}]
  %s3 = inlined_call_operand.vmem [shape: f32[8,1], index: 3, kind: output, shape index: {}]
  %s4 = sld [smem:[#allocation0]]
  $region26: #{tpu_custom_call.1} parent=0
    _
  %s6 = ssub.s32 1, %s4
  %s7 = scalar_select 0, %s6, %s4
  %8 = sst [smem:[#allocation2]] %s2
  $region1: #{tpu_custom_call.1} parent=0
    #allocation3 [shape = 'u8[4096]{0}', space=vmem, size = 0x1000, scoped, tag = 'input window, operand 0, single buffered']
    #allocation4 [shape = 's32[1]{0}', space=sflag, size = 0x4, scoped, tag = 'scoped memory for tpu_custom_call.1']
    %9 = vsyncpa [#allocation4], 0
    // Predicated region
    $region2: #{tpu_custom_call.1} parent=1 // pred_check
      _
    $region3: #{tpu_custom_call.1} parent=1 // pred_check_branch
      %11 = sbr.rel (0) target = $region5
    $region4: #{tpu_custom_call.1} parent=1 // pred_region
      %s13 = ssub.s32 128, 128
      %14 = vsyncadd [#allocation4], %s13
      %s16 = sshll.u32 [#allocation3], 4
      %s17 = int_to_ptr.vmem [resolvable:$true] %s16
      %19 = dma.hbm_to_vmem [thread:$0]  %s0, 128, %s17, [#allocation4]
    $region5: #{tpu_custom_call.1} parent=1 // pred_fallthru
      _
    // Predicated region
    $region6: #{tpu_custom_call.1} parent=1 // pred_check
      _
    $region7: #{tpu_custom_call.1} parent=1 // pred_check_branch
      %21 = sbr.rel (0) target = $region9
    $region8: #{tpu_custom_call.1} parent=1 // pred_region
      _
    $region9: #{tpu_custom_call.1} parent=1 // pred_fallthru
      _
    // Predicated region
    $region10: #{tpu_custom_call.1} parent=1 // pred_check
      _
    $region11: #{tpu_custom_call.1} parent=1 // pred_check_branch
      %23 = sbr.rel (0) target = $region13
    $region12: #{tpu_custom_call.1} parent=1 // pred_region
      _
    $region13: #{tpu_custom_call.1} parent=1 // pred_fallthru
      _
    // Predicated region
    $region14: #{tpu_custom_call.1} parent=1 // pred_check
      _
    $region15: #{tpu_custom_call.1} parent=1 // pred_check_branch
      %25 = sbr.rel (0) target = $region17
    $region16: #{tpu_custom_call.1} parent=1 // pred_region
      %26 = dma.done [#allocation4], 128
    $region17: #{tpu_custom_call.1} parent=1 // pred_fallthru
      _
    %v27 = vld [vmem:[#allocation3] sm:$0xff]
    %v28 = vld [vmem:[%s1] sm:$0x1]
    %v30 = vlaneseq
    %v31 = vshrl.u32 %v30, 7
    %v32 = vsub.s32 0, %v31
    %v33 = vrot.slane %v28, %v32
    %v35 = vmul.f32 %v27, %v33
    %vm36 = vcmask 261120
    %v37 = vsel %vm36, %v35, 0.0
    %38 = vadd.xlane.f32.xlu0 %v37
    %v39 = vpop.xlane.xlu0 %38
    %s40 = sld [smem:[#allocation2]]
    %v41 = vstv %s40
    %v42 = vadd.f32 %v39, %v41
    %v43 = vsub.f32 0.0, %v42
    %v44 = vmul.f32 %v43, 1.442695
    %v45 = vpow.pop %v44
    %v46 = vadd.f32 %v45, 1.0
    %v47 = vrcp.pop %v46
    %vm48 = vcmask 7168
    %49 = vst.msk [vmem:[%s3] sm:$0xff] %vm48, %v47
    // Predicated region
    $region18: #{tpu_custom_call.1} parent=1 // pred_check
      _
    $region19: #{tpu_custom_call.1} parent=1 // pred_check_branch
      %51 = sbr.rel (0) target = $region21
    $region20: #{tpu_custom_call.1} parent=1 // pred_region
      _
    $region21: #{tpu_custom_call.1} parent=1 // pred_fallthru
      _
    // Predicated region
    $region22: #{tpu_custom_call.1} parent=1 // pred_check
      _
    $region23: #{tpu_custom_call.1} parent=1 // pred_check_branch
      %53 = sbr.rel (0) target = $region25
    $region24: #{tpu_custom_call.1} parent=1 // pred_region
      _
    $region25: #{tpu_custom_call.1} parent=1 // pred_fallthru
      _
    %54 = vsyncpa [#allocation4], 1

</llo_original>
